<compile_context>
chip_gen: v6e
topology: v6e:2x2x1
jax: 0.10.0
libtpu: 0.0.40
codegen_flags: <defaults>
</compile_context>

<pallas_src>
import math

import jax
import jax.numpy as jnp
from jax.experimental import pallas as pl
from jax.experimental.pallas import tpu as pltpu

# real / lane-padded feature dims
IN, HID, LAT = 100, 50, 5
IN_P, HID_P, LAT_P = 128, 128, 128


def _vae_kernel(x_ref, eps_ref,
                w1_ref, b1_ref,
                wenc_ref, benc_ref,
                w3_ref, b3_ref,
                w4_ref, b4_ref,
                recon_ref, stats_ref):
    x = x_ref[...]                                              # (TB, 128)

    # ---- encode ----
    h1 = jnp.dot(x, w1_ref[...], preferred_element_type=jnp.float32) + b1_ref[...]
    h1 = jnp.maximum(h1, 0.0)                                   # (TB, 128)

    # fused mu/logvar head: lanes [0:128) = mu block, [128:256) = logvar block
    stats = jnp.dot(h1, wenc_ref[...],
                    preferred_element_type=jnp.float32) + benc_ref[...]
    stats_ref[...] = stats                                      # lane-dense store

    mu = stats[:, :LAT_P]                                       # vreg-aligned slice
    logvar = stats[:, LAT_P:]

    # ---- reparameterise (eps is zero-padded beyond the 5 real latents) ----
    std = jnp.exp(0.5 * logvar)
    z = mu + eps_ref[...] * std                                 # (TB, 128)

    # ---- decode ----
    h3 = jnp.dot(z, w3_ref[...], preferred_element_type=jnp.float32) + b3_ref[...]
    h3 = jnp.maximum(h3, 0.0)                                   # (TB, 128)

    logits = jnp.dot(h3, w4_ref[...], preferred_element_type=jnp.float32) + b4_ref[...]
    recon_ref[...] = jax.nn.sigmoid(logits)                     # logistic -> EUP


def _pad2(a, rows, cols):
    r, c = a.shape
    return jnp.pad(a, ((0, rows - r), (0, cols - c)))


def vae_forward(x, eps, params, *, max_tile=512):
    """x: (B, 100) f32, eps: (B, 5) f32, params: dict (weights stored (in, out))."""
    B = x.shape[0]
    # batch tile: multiple of 8 sublanes, capped (VMEM-friendly on v7x's 64 MiB)
    TB = min(max_tile, max(8, ((B + 7) // 8) * 8))
    B_p = pl.cdiv(B, TB) * TB
    grid = (B_p // TB,)

    xp = _pad2(x.astype(jnp.float32), B_p, IN_P)
    epsp = _pad2(eps.astype(jnp.float32), B_p, LAT_P)

    w1p = _pad2(params["w1"], IN_P, HID_P)
    b1p = _pad2(params["b1"], 1, HID_P)
    wencp = jnp.concatenate([_pad2(params["w21"], HID_P, LAT_P),
                             _pad2(params["w22"], HID_P, LAT_P)], axis=1)
    bencp = jnp.concatenate([_pad2(params["b21"], 1, LAT_P),
                             _pad2(params["b22"], 1, LAT_P)], axis=1)
    w3p = _pad2(params["w3"], LAT_P, HID_P)
    b3p = _pad2(params["b3"], 1, HID_P)
    w4p = _pad2(params["w4"], HID_P, IN_P)
    b4p = _pad2(params["b4"], 1, IN_P)

    def batch_spec(width):
        return pl.BlockSpec((TB, width), lambda i: (i, 0),
                            memory_space=pltpu.MemorySpace.VMEM)

    def resident(shape):  # full array, same block every step -> stays in VMEM
        return pl.BlockSpec(shape, lambda i: (0, 0),
                            memory_space=pltpu.MemorySpace.VMEM)

    recon_p, stats_p = pl.pallas_call(
        _vae_kernel,
        grid=grid,
        in_specs=[
            batch_spec(IN_P), batch_spec(LAT_P),
            resident((IN_P, HID_P)), resident((1, HID_P)),
            resident((HID_P, 2 * LAT_P)), resident((1, 2 * LAT_P)),
            resident((LAT_P, HID_P)), resident((1, HID_P)),
            resident((HID_P, IN_P)), resident((1, IN_P)),
        ],
        out_specs=(batch_spec(IN_P), batch_spec(2 * LAT_P)),
        out_shape=(jax.ShapeDtypeStruct((B_p, IN_P), jnp.float32),
                   jax.ShapeDtypeStruct((B_p, 2 * LAT_P), jnp.float32)),
        compiler_params=pltpu.CompilerParams(
            dimension_semantics=("parallel",)),
    )(xp, epsp, w1p, b1p, wencp, bencp, w3p, b3p, w4p, b4p)

    recon = recon_p[:B, :IN]
    mu = stats_p[:B, :LAT]
    logvar = stats_p[:B, LAT_P:LAT_P + LAT]
    return recon, mu, logvar


def init_params(key):
    """Mirrors nn.Linear's U(-1/sqrt(fan_in), 1/sqrt(fan_in)); weights stored (in, out)."""
    dims = {"w1": (100, 50), "w21": (50, 5), "w22": (50, 5),
            "w3": (5, 50), "w4": (50, 100)}
    params = {}
    for i, (name, (fan_in, fan_out)) in enumerate(dims.items()):
        kw, kb = jax.random.split(jax.random.fold_in(key, i))
        bound = 1.0 / math.sqrt(fan_in)
        params[name] = jax.random.uniform(
            kw, (fan_in, fan_out), jnp.float32, -bound, bound)
        params["b" + name[1:]] = jax.random.uniform(
            kb, (1, fan_out), jnp.float32, -bound, bound)
    return params


if __name__ == "__main__":
    key = jax.random.PRNGKey(0)
    k_params, k_x, k_eps = jax.random.split(key, 3)

    params = init_params(k_params)

    B = 2
    x = jax.random.normal(k_x, (B, 100), jnp.float32)
    # eps ~ N(0,1) supplied from outside the kernel (torch.randn_like equivalent)
    eps = jax.random.normal(k_eps, (B, 5), jnp.float32)

    recon, mu, logvar = vae_forward(x, eps, params)
    jax.block_until_ready((recon, mu, logvar))

    # Pure-JAX reference check.
    h1 = jnp.maximum(x @ params["w1"] + params["b1"], 0.0)
    mu_r = h1 @ params["w21"] + params["b21"]
    lv_r = h1 @ params["w22"] + params["b22"]
    z = mu_r + eps * jnp.exp(0.5 * lv_r)
    h3 = jnp.maximum(z @ params["w3"] + params["b3"], 0.0)
    rec_r = jax.nn.sigmoid(h3 @ params["w4"] + params["b4"])

    assert jnp.allclose(recon, rec_r, atol=1e-5)
    assert jnp.allclose(mu, mu_r, atol=1e-5)
    assert jnp.allclose(logvar, lv_r, atol=1e-5)

    print("KERNEL_OK")
</pallas_src>

<mosaic_0001>
module attributes {stable_mosaic.version = 11 : i64} {
  func.func @_vae_kernel(%arg0: i32, %arg1: memref<8x128xf32, #tpu.memory_space<vmem>>, %arg2: memref<8x128xf32, #tpu.memory_space<vmem>>, %arg3: memref<128x128xf32, #tpu.memory_space<vmem>>, %arg4: memref<1x128xf32, #tpu.memory_space<vmem>>, %arg5: memref<128x256xf32, #tpu.memory_space<vmem>>, %arg6: memref<1x256xf32, #tpu.memory_space<vmem>>, %arg7: memref<128x128xf32, #tpu.memory_space<vmem>>, %arg8: memref<1x128xf32, #tpu.memory_space<vmem>>, %arg9: memref<128x128xf32, #tpu.memory_space<vmem>>, %arg10: memref<1x128xf32, #tpu.memory_space<vmem>>, %arg11: memref<8x128xf32, #tpu.memory_space<vmem>>, %arg12: memref<8x256xf32, #tpu.memory_space<vmem>>) attributes {dimension_semantics = [#tpu.dimension_semantics<parallel>], iteration_bounds = array<i64: 1>, scalar_prefetch = 0 : i64, scratch_operands = 0 : i64, tpu.core_type = #tpu.core_type<tc>, window_params = [{transform_indices = @transform_0, window_bounds = array<i64: 8, 128>}, {transform_indices = @transform_1, window_bounds = array<i64: 8, 128>}, {pipeline_mode = #tpu.pipeline_mode<synchronous>, transform_indices = @transform_2, window_bounds = array<i64: 128, 128>}, {pipeline_mode = #tpu.pipeline_mode<synchronous>, transform_indices = @transform_3, window_bounds = array<i64: 1, 128>}, {pipeline_mode = #tpu.pipeline_mode<synchronous>, transform_indices = @transform_4, window_bounds = array<i64: 128, 256>}, {pipeline_mode = #tpu.pipeline_mode<synchronous>, transform_indices = @transform_5, window_bounds = array<i64: 1, 256>}, {pipeline_mode = #tpu.pipeline_mode<synchronous>, transform_indices = @transform_6, window_bounds = array<i64: 128, 128>}, {pipeline_mode = #tpu.pipeline_mode<synchronous>, transform_indices = @transform_7, window_bounds = array<i64: 1, 128>}, {pipeline_mode = #tpu.pipeline_mode<synchronous>, transform_indices = @transform_8, window_bounds = array<i64: 128, 128>}, {pipeline_mode = #tpu.pipeline_mode<synchronous>, transform_indices = @transform_9, window_bounds = array<i64: 1, 128>}, {transform_indices = @transform_10, window_bounds = array<i64: 8, 128>}, {transform_indices = @transform_11, window_bounds = array<i64: 8, 256>}]} {
    %c0 = arith.constant 0 : index
    %c0_0 = arith.constant 0 : index
    %0 = vector.load %arg1[%c0, %c0_0] : memref<8x128xf32, #tpu.memory_space<vmem>>, vector<8x128xf32>
    %c0_1 = arith.constant 0 : index
    %c0_2 = arith.constant 0 : index
    %1 = vector.load %arg3[%c0_1, %c0_2] : memref<128x128xf32, #tpu.memory_space<vmem>>, vector<128x128xf32>
    %cst = arith.constant dense<0.000000e+00> : vector<8x128xf32>
    %2 = tpu.matmul %0, %1, %cst {dimension_numbers = #tpu.dot_dimension_numbers<[1], [0], [0], [1], [0, 0, 1, 1], [], []>} : vector<8x128xf32>, vector<128x128xf32>, vector<8x128xf32> -> vector<8x128xf32>
    %c0_3 = arith.constant 0 : index
    %c0_4 = arith.constant 0 : index
    %3 = vector.load %arg4[%c0_3, %c0_4] : memref<1x128xf32, #tpu.memory_space<vmem>>, vector<1x128xf32>
    %4 = vector.broadcast %3 : vector<1x128xf32> to vector<8x128xf32>
    %5 = arith.addf %2, %4 : vector<8x128xf32>
    %cst_5 = arith.constant 0.000000e+00 : f32
    %6 = vector.broadcast %cst_5 : f32 to vector<8x128xf32>
    %7 = arith.maximumf %5, %6 : vector<8x128xf32>
    %c0_6 = arith.constant 0 : index
    %c0_7 = arith.constant 0 : index
    %8 = vector.load %arg5[%c0_6, %c0_7] : memref<128x256xf32, #tpu.memory_space<vmem>>, vector<128x256xf32>
    %cst_8 = arith.constant dense<0.000000e+00> : vector<8x256xf32>
    %9 = tpu.matmul %7, %8, %cst_8 {dimension_numbers = #tpu.dot_dimension_numbers<[1], [0], [0], [1], [0, 0, 1, 1], [], []>} : vector<8x128xf32>, vector<128x256xf32>, vector<8x256xf32> -> vector<8x256xf32>
    %c0_9 = arith.constant 0 : index
    %c0_10 = arith.constant 0 : index
    %10 = vector.load %arg6[%c0_9, %c0_10] : memref<1x256xf32, #tpu.memory_space<vmem>>, vector<1x256xf32>
    %11 = vector.broadcast %10 : vector<1x256xf32> to vector<8x256xf32>
    %12 = arith.addf %9, %11 : vector<8x256xf32>
    %c0_11 = arith.constant 0 : index
    %c0_12 = arith.constant 0 : index
    %13 = vector.load %arg12[%c0_11, %c0_12] : memref<8x256xf32, #tpu.memory_space<vmem>>, vector<8x256xf32>
    tpu.vector_store %arg12[%c0_11, %c0_12], %12 {strides = array<i32>} : memref<8x256xf32, #tpu.memory_space<vmem>>, vector<8x256xf32>,
    %14 = vector.extract_strided_slice %12 {offsets = [0, 0], sizes = [8, 128], strides = [1, 1]} : vector<8x256xf32> to vector<8x128xf32>
    %15 = vector.extract_strided_slice %12 {offsets = [0, 128], sizes = [8, 128], strides = [1, 1]} : vector<8x256xf32> to vector<8x128xf32>
    %cst_13 = arith.constant 5.000000e-01 : f32
    %16 = vector.broadcast %cst_13 : f32 to vector<8x128xf32>
    %17 = arith.mulf %16, %15 : vector<8x128xf32>
    %18 = math.exp %17 : vector<8x128xf32>
    %c0_14 = arith.constant 0 : index
    %c0_15 = arith.constant 0 : index
    %19 = vector.load %arg2[%c0_14, %c0_15] : memref<8x128xf32, #tpu.memory_space<vmem>>, vector<8x128xf32>
    %20 = arith.mulf %19, %18 : vector<8x128xf32>
    %21 = arith.addf %14, %20 : vector<8x128xf32>
    %c0_16 = arith.constant 0 : index
    %c0_17 = arith.constant 0 : index
    %22 = vector.load %arg7[%c0_16, %c0_17] : memref<128x128xf32, #tpu.memory_space<vmem>>, vector<128x128xf32>
    %cst_18 = arith.constant dense<0.000000e+00> : vector<8x128xf32>
    %23 = tpu.matmul %21, %22, %cst_18 {dimension_numbers = #tpu.dot_dimension_numbers<[1], [0], [0], [1], [0, 0, 1, 1], [], []>} : vector<8x128xf32>, vector<128x128xf32>, vector<8x128xf32> -> vector<8x128xf32>
    %c0_19 = arith.constant 0 : index
    %c0_20 = arith.constant 0 : index
    %24 = vector.load %arg8[%c0_19, %c0_20] : memref<1x128xf32, #tpu.memory_space<vmem>>, vector<1x128xf32>
    %25 = vector.broadcast %24 : vector<1x128xf32> to vector<8x128xf32>
    %26 = arith.addf %23, %25 : vector<8x128xf32>
    %cst_21 = arith.constant 0.000000e+00 : f32
    %27 = vector.broadcast %cst_21 : f32 to vector<8x128xf32>
    %28 = arith.maximumf %26, %27 : vector<8x128xf32>
    %c0_22 = arith.constant 0 : index
    %c0_23 = arith.constant 0 : index
    %29 = vector.load %arg9[%c0_22, %c0_23] : memref<128x128xf32, #tpu.memory_space<vmem>>, vector<128x128xf32>
    %cst_24 = arith.constant dense<0.000000e+00> : vector<8x128xf32>
    %30 = tpu.matmul %28, %29, %cst_24 {dimension_numbers = #tpu.dot_dimension_numbers<[1], [0], [0], [1], [0, 0, 1, 1], [], []>} : vector<8x128xf32>, vector<128x128xf32>, vector<8x128xf32> -> vector<8x128xf32>
    %c0_25 = arith.constant 0 : index
    %c0_26 = arith.constant 0 : index
    %31 = vector.load %arg10[%c0_25, %c0_26] : memref<1x128xf32, #tpu.memory_space<vmem>>, vector<1x128xf32>
    %32 = vector.broadcast %31 : vector<1x128xf32> to vector<8x128xf32>
    %33 = arith.addf %30, %32 : vector<8x128xf32>
    %34 = arith.negf %33 : vector<8x128xf32>
    %35 = math.exp %34 : vector<8x128xf32>
    %cst_27 = arith.constant 1.000000e+00 : f32
    %36 = vector.broadcast %cst_27 : f32 to vector<8x128xf32>
    %37 = arith.addf %36, %35 : vector<8x128xf32>
    %38 = arith.divf %36, %37 : vector<8x128xf32>
    %c0_28 = arith.constant 0 : index
    %c0_29 = arith.constant 0 : index
    %39 = vector.load %arg11[%c0_28, %c0_29] : memref<8x128xf32, #tpu.memory_space<vmem>>, vector<8x128xf32>
    tpu.vector_store %arg11[%c0_28, %c0_29], %38 {strides = array<i32>} : memref<8x128xf32, #tpu.memory_space<vmem>>, vector<8x128xf32>,
    return
  }
  func.func @transform_0(%arg0: i32) -> (i32, i32) {
    %c0_i32 = arith.constant 0 : i32
    %c0_i32_0 = arith.constant 0 : i32
    return %arg0, %c0_i32 : i32, i32
  }
  func.func @transform_1(%arg0: i32) -> (i32, i32) {
    %c0_i32 = arith.constant 0 : i32
    %c0_i32_0 = arith.constant 0 : i32
    return %arg0, %c0_i32 : i32, i32
  }
  func.func @transform_2(%arg0: i32) -> (i32, i32) {
    %c0_i32 = arith.constant 0 : i32
    %c0_i32_0 = arith.constant 0 : i32
    %c0_i32_1 = arith.constant 0 : i32
    return %c0_i32, %c0_i32_0 : i32, i32
  }
  func.func @transform_3(%arg0: i32) -> (i32, i32) {
    %c0_i32 = arith.constant 0 : i32
    %c0_i32_0 = arith.constant 0 : i32
    %c0_i32_1 = arith.constant 0 : i32
    return %c0_i32, %c0_i32_0 : i32, i32
  }
  func.func @transform_4(%arg0: i32) -> (i32, i32) {
    %c0_i32 = arith.constant 0 : i32
    %c0_i32_0 = arith.constant 0 : i32
    %c0_i32_1 = arith.constant 0 : i32
    return %c0_i32, %c0_i32_0 : i32, i32
  }
  func.func @transform_5(%arg0: i32) -> (i32, i32) {
    %c0_i32 = arith.constant 0 : i32
    %c0_i32_0 = arith.constant 0 : i32
    %c0_i32_1 = arith.constant 0 : i32
    return %c0_i32, %c0_i32_0 : i32, i32
  }
  func.func @transform_6(%arg0: i32) -> (i32, i32) {
    %c0_i32 = arith.constant 0 : i32
    %c0_i32_0 = arith.constant 0 : i32
    %c0_i32_1 = arith.constant 0 : i32
    return %c0_i32, %c0_i32_0 : i32, i32
  }
  func.func @transform_7(%arg0: i32) -> (i32, i32) {
    %c0_i32 = arith.constant 0 : i32
    %c0_i32_0 = arith.constant 0 : i32
    %c0_i32_1 = arith.constant 0 : i32
    return %c0_i32, %c0_i32_0 : i32, i32
  }
  func.func @transform_8(%arg0: i32) -> (i32, i32) {
    %c0_i32 = arith.constant 0 : i32
    %c0_i32_0 = arith.constant 0 : i32
    %c0_i32_1 = arith.constant 0 : i32
    return %c0_i32, %c0_i32_0 : i32, i32
  }
  func.func @transform_9(%arg0: i32) -> (i32, i32) {
    %c0_i32 = arith.constant 0 : i32
    %c0_i32_0 = arith.constant 0 : i32
    %c0_i32_1 = arith.constant 0 : i32
    return %c0_i32, %c0_i32_0 : i32, i32
  }
  func.func @transform_10(%arg0: i32) -> (i32, i32) {
    %c0_i32 = arith.constant 0 : i32
    %c0_i32_0 = arith.constant 0 : i32
    return %arg0, %c0_i32 : i32, i32
  }
  func.func @transform_11(%arg0: i32) -> (i32, i32) {
    %c0_i32 = arith.constant 0 : i32
    %c0_i32_0 = arith.constant 0 : i32
    return %arg0, %c0_i32 : i32, i32
  }
}

</mosaic_0001>

<llo_original>
// kernel: tpu_custom_call.1
$region0: #{tpu_custom_call.1}
  #allocation0 [shape = 'u32[]', space=smem, size = 0x4, offset = 0x4, fixed_abs, tag = 'smem constant byte address 0x4 - core index']
  #allocation1 [shape = 'u32[144,128]{1,0:T(1,128)}', space=vmem, size = 0x12000, scoped, tag = 'internal scratch']
  %s0 = inlined_call_operand.hbm [shape: f32[8,128], index: 0, kind: input, shape index: {}]
  %s1 = inlined_call_operand.hbm [shape: f32[8,128], index: 1, kind: input, shape index: {}]
  %s2 = inlined_call_operand.hbm [shape: f32[128,128], index: 2, kind: input, shape index: {}]
  %s3 = inlined_call_operand.vmem [shape: f32[1,128], index: 3, kind: input, shape index: {}]
  %s4 = inlined_call_operand.hbm [shape: f32[128,256], index: 4, kind: input, shape index: {}]
  %s5 = inlined_call_operand.vmem [shape: f32[1,256], index: 5, kind: input, shape index: {}]
  %s6 = inlined_call_operand.hbm [shape: f32[128,128], index: 6, kind: input, shape index: {}]
  %s7 = inlined_call_operand.vmem [shape: f32[1,128], index: 7, kind: input, shape index: {}]
  %s8 = inlined_call_operand.hbm [shape: f32[128,128], index: 8, kind: input, shape index: {}]
  %s9 = inlined_call_operand.vmem [shape: f32[1,128], index: 9, kind: input, shape index: {}]
  %s10 = inlined_call_operand.hbm [shape: f32[8,128], index: 10, kind: output, shape index: {0}]
  %s11 = inlined_call_operand.hbm [shape: f32[8,256], index: 11, kind: output, shape index: {1}]
  %12 = xla_tuple %s10, %s11
  %s13 = sld [smem:[#allocation0]]
  $region82: #{tpu_custom_call.1} parent=0
    _
  %s15 = ssub.s32 1, %s13
  %s16 = scalar_select 0, %s15, %s13
  $region1: #{tpu_custom_call.1} parent=0
    #allocation2 [shape = 'u8[4096]{0}', space=vmem, size = 0x1000, scoped, tag = 'input window, operand 0, single buffered']
    #allocation3 [shape = 's32[1]{0}', space=sflag, size = 0x4, scoped, tag = 'scoped memory for tpu_custom_call.1']
    #allocation4 [shape = 's32[1]{0}', space=sflag, size = 0x4, scoped, tag = 'scoped memory for tpu_custom_call.1']
    #allocation5 [shape = 'u8[4096]{0}', space=vmem, size = 0x1000, scoped, tag = 'input window, operand 1, single buffered']
    #allocation6 [shape = 's32[1]{0}', space=sflag, size = 0x4, scoped, tag = 'scoped memory for tpu_custom_call.1']
    #allocation7 [shape = 'u8[65536]{0}', space=vmem, size = 0x10000, scoped, tag = 'input window, operand 2, single buffered']
    #allocation8 [shape = 'u8[131072]{0}', space=vmem, size = 0x20000, scoped, tag = 'input window, operand 4, single buffered']
    #allocation9 [shape = 's32[1]{0}', space=sflag, size = 0x4, scoped, tag = 'scoped memory for tpu_custom_call.1']
    #allocation10 [shape = 'u8[65536]{0}', space=vmem, size = 0x10000, scoped, tag = 'input window, operand 6, single buffered']
    #allocation11 [shape = 'u8[65536]{0}', space=vmem, size = 0x10000, scoped, tag = 'input window, operand 8, single buffered']
    #allocation12 [shape = 's32[1]{0}', space=sflag, size = 0x4, scoped, tag = 'scoped memory for tpu_custom_call.1']
    #allocation13 [shape = 'u8[4096]{0}', space=vmem, size = 0x1000, scoped, tag = 'output window, operand 0, single buffered']
    #allocation14 [shape = 'u8[8192]{0}', space=vmem, size = 0x2000, scoped, tag = 'output window, operand 1, single buffered']
    #allocation15 [shape = 's32[1]{0}', space=sflag, size = 0x4, scoped, tag = 'scoped memory for tpu_custom_call.1']
    %17 = vsyncpa [#allocation3], 0
    %18 = vsyncpa [#allocation6], 0
    %19 = vsyncpa [#allocation9], 0
    %20 = vsyncpa [#allocation12], 0
    %21 = vsyncpa [#allocation4], 0
    %22 = vsyncpa [#allocation15], 0
    // Predicated region
    $region2: #{tpu_custom_call.1} parent=1 // pred_check
      _
    $region3: #{tpu_custom_call.1} parent=1 // pred_check_branch
      %24 = sbr.rel (0) target = $region5
    $region4: #{tpu_custom_call.1} parent=1 // pred_region
      %s26 = ssub.s32 128, 128
      %27 = vsyncadd [#allocation3], %s26
      %s29 = sshll.u32 [#allocation2], 4
      %s30 = int_to_ptr.vmem [resolvable:$true] %s29
      %32 = dma.hbm_to_vmem [thread:$0]  %s0, 128, %s30, [#allocation3]
    $region5: #{tpu_custom_call.1} parent=1 // pred_fallthru
      _
    // Predicated region
    $region6: #{tpu_custom_call.1} parent=1 // pred_check
      _
    $region7: #{tpu_custom_call.1} parent=1 // pred_check_branch
      %34 = sbr.rel (0) target = $region9
    $region8: #{tpu_custom_call.1} parent=1 // pred_region
      %s36 = ssub.s32 128, 128
      %37 = vsyncadd [#allocation6], %s36
      %s39 = sshll.u32 [#allocation5], 4
      %s40 = int_to_ptr.vmem [resolvable:$true] %s39
      %42 = dma.hbm_to_vmem [thread:$0]  %s1, 128, %s40, [#allocation6]
    $region9: #{tpu_custom_call.1} parent=1 // pred_fallthru
      _
    // Predicated region
    $region10: #{tpu_custom_call.1} parent=1 // pred_check
      _
    $region11: #{tpu_custom_call.1} parent=1 // pred_check_branch
      %44 = sbr.rel (0) target = $region13
    $region12: #{tpu_custom_call.1} parent=1 // pred_region
      %s46 = ssub.s32 2048, 2048
      %47 = vsyncadd [#allocation6], %s46
      %s48 = sshll.u32 [#allocation7], 4
      %s49 = int_to_ptr.vmem [resolvable:$true] %s48
      %54 = dma.hbm_to_vmem [thread:$0]  %s2, 2048, %s49, [#allocation6], 128, 128, 8
    $region13: #{tpu_custom_call.1} parent=1 // pred_fallthru
      _
    // Predicated region
    $region14: #{tpu_custom_call.1} parent=1 // pred_check
      _
    $region15: #{tpu_custom_call.1} parent=1 // pred_check_branch
      %56 = sbr.rel (0) target = $region17
    $region16: #{tpu_custom_call.1} parent=1 // pred_region
      _
    $region17: #{tpu_custom_call.1} parent=1 // pred_fallthru
      _
    // Predicated region
    $region18: #{tpu_custom_call.1} parent=1 // pred_check
      _
    $region19: #{tpu_custom_call.1} parent=1 // pred_check_branch
      %58 = sbr.rel (0) target = $region21
    $region20: #{tpu_custom_call.1} parent=1 // pred_region
      %s60 = ssub.s32 4096, 4096
      %61 = vsyncadd [#allocation9], %s60
      %s62 = sshll.u32 [#allocation8], 4
      %s63 = int_to_ptr.vmem [resolvable:$true] %s62
      %68 = dma.hbm_to_vmem [thread:$0]  %s4, 4096, %s63, [#allocation9], 256, 256, 16
    $region21: #{tpu_custom_call.1} parent=1 // pred_fallthru
      _
    // Predicated region
    $region22: #{tpu_custom_call.1} parent=1 // pred_check
      _
    $region23: #{tpu_custom_call.1} parent=1 // pred_check_branch
      %70 = sbr.rel (0) target = $region25
    $region24: #{tpu_custom_call.1} parent=1 // pred_region
      _
    $region25: #{tpu_custom_call.1} parent=1 // pred_fallthru
      _
    // Predicated region
    $region26: #{tpu_custom_call.1} parent=1 // pred_check
      _
    $region27: #{tpu_custom_call.1} parent=1 // pred_check_branch
      %72 = sbr.rel (0) target = $region29
    $region28: #{tpu_custom_call.1} parent=1 // pred_region
      %s74 = ssub.s32 2048, 2048
      %75 = vsyncadd [#allocation9], %s74
      %s76 = sshll.u32 [#allocation10], 4
      %s77 = int_to_ptr.vmem [resolvable:$true] %s76
      %82 = dma.hbm_to_vmem [thread:$0]  %s6, 2048, %s77, [#allocation9], 128, 128, 8
    $region29: #{tpu_custom_call.1} parent=1 // pred_fallthru
      _
    // Predicated region
    $region30: #{tpu_custom_call.1} parent=1 // pred_check
      _
    $region31: #{tpu_custom_call.1} parent=1 // pred_check_branch
      %84 = sbr.rel (0) target = $region33
    $region32: #{tpu_custom_call.1} parent=1 // pred_region
      _
    $region33: #{tpu_custom_call.1} parent=1 // pred_fallthru
      _
    // Predicated region
    $region34: #{tpu_custom_call.1} parent=1 // pred_check
      _
    $region35: #{tpu_custom_call.1} parent=1 // pred_check_branch
      %86 = sbr.rel (0) target = $region37
    $region36: #{tpu_custom_call.1} parent=1 // pred_region
      %s88 = ssub.s32 2048, 2048
      %89 = vsyncadd [#allocation12], %s88
      %s90 = sshll.u32 [#allocation11], 4
      %s91 = int_to_ptr.vmem [resolvable:$true] %s90
      %96 = dma.hbm_to_vmem [thread:$0]  %s8, 2048, %s91, [#allocation12], 128, 128, 8
    $region37: #{tpu_custom_call.1} parent=1 // pred_fallthru
      _
    // Predicated region
    $region38: #{tpu_custom_call.1} parent=1 // pred_check
      _
    $region39: #{tpu_custom_call.1} parent=1 // pred_check_branch
      %98 = sbr.rel (0) target = $region41
    $region40: #{tpu_custom_call.1} parent=1 // pred_region
      _
    $region41: #{tpu_custom_call.1} parent=1 // pred_fallthru
      _
    // Predicated region
    $region42: #{tpu_custom_call.1} parent=1 // pred_check
      _
    $region43: #{tpu_custom_call.1} parent=1 // pred_check_branch
      %100 = sbr.rel (0) target = $region45
    $region44: #{tpu_custom_call.1} parent=1 // pred_region
      %101 = dma.done [#allocation3], 128
    $region45: #{tpu_custom_call.1} parent=1 // pred_fallthru
      _
    // Predicated region
    $region46: #{tpu_custom_call.1} parent=1 // pred_check
      _
    $region47: #{tpu_custom_call.1} parent=1 // pred_check_branch
      %103 = sbr.rel (0) target = $region49
    $region48: #{tpu_custom_call.1} parent=1 // pred_region
      %104 = dma.done [#allocation6], 128
    $region49: #{tpu_custom_call.1} parent=1 // pred_fallthru
      _
    // Predicated region
    $region50: #{tpu_custom_call.1} parent=1 // pred_check
      _
    $region51: #{tpu_custom_call.1} parent=1 // pred_check_branch
      %106 = sbr.rel (0) target = $region53
    $region52: #{tpu_custom_call.1} parent=1 // pred_region
      %107 = dma.done [#allocation6], 2048
    $region53: #{tpu_custom_call.1} parent=1 // pred_fallthru
      _
    // Predicated region
    $region54: #{tpu_custom_call.1} parent=1 // pred_check
      _
    $region55: #{tpu_custom_call.1} parent=1 // pred_check_branch
      %109 = sbr.rel (0) target = $region57
    $region56: #{tpu_custom_call.1} parent=1 // pred_region
      %110 = dma.done [#allocation9], 4096
    $region57: #{tpu_custom_call.1} parent=1 // pred_fallthru
      _
    // Predicated region
    $region58: #{tpu_custom_call.1} parent=1 // pred_check
      _
    $region59: #{tpu_custom_call.1} parent=1 // pred_check_branch
      %112 = sbr.rel (0) target = $region61
    $region60: #{tpu_custom_call.1} parent=1 // pred_region
      %113 = dma.done [#allocation9], 2048
    $region61: #{tpu_custom_call.1} parent=1 // pred_fallthru
      _
    // Predicated region
    $region62: #{tpu_custom_call.1} parent=1 // pred_check
      _
    $region63: #{tpu_custom_call.1} parent=1 // pred_check_branch
      %115 = sbr.rel (0) target = $region65
    $region64: #{tpu_custom_call.1} parent=1 // pred_region
      %116 = dma.done [#allocation12], 2048
    $region65: #{tpu_custom_call.1} parent=1 // pred_fallthru
      _
    %v117 = vld [vmem:[#allocation2] sm:$0xff]
    %v118 = vld [vmem:[#allocation7] sm:$0xff]
    %v119 = vld [vmem:[#allocation7 + $0x8] sm:$0xff]
    %v120 = vld [vmem:[#allocation7 + $0x10] sm:$0xff]
    %v121 = vld [vmem:[#allocation7 + $0x18] sm:$0xff]
    %v122 = vld [vmem:[#allocation7 + $0x20] sm:$0xff]
    %v123 = vld [vmem:[#allocation7 + $0x28] sm:$0xff]
    %v124 = vld [vmem:[#allocation7 + $0x30] sm:$0xff]
    %v125 = vld [vmem:[#allocation7 + $0x38] sm:$0xff]
    %v126 = vld [vmem:[#allocation7 + $0x40] sm:$0xff]
    %v127 = vld [vmem:[#allocation7 + $0x48] sm:$0xff]
    %v128 = vld [vmem:[#allocation7 + $0x50] sm:$0xff]
    %v129 = vld [vmem:[#allocation7 + $0x58] sm:$0xff]
    %v130 = vld [vmem:[#allocation7 + $0x60] sm:$0xff]
    %v131 = vld [vmem:[#allocation7 + $0x68] sm:$0xff]
    %v132 = vld [vmem:[#allocation7 + $0x70] sm:$0xff]
    %v133 = vld [vmem:[#allocation7 + $0x78] sm:$0xff]
    %v134 = vld [vmem:[%s3] sm:$0x1]
    %v136 = vlaneseq
    %v137 = vshrl.u32 %v136, 7
    %v138 = vsub.s32 0, %v137
    %v139 = vrot.slane %v134, %v138
    %141 = vmatprep.subr.mxu0 0.0
    %142 = vmatpush1.msra.mxu0 %v133
    %143 = vmatprep.subr.mxu0 0.0
    %144 = vmatpush1.msra.mxu0 %v132
    %145 = vmatprep.subr.mxu0 0.0
    %146 = vmatpush1.msra.mxu0 %v131
    %147 = vmatprep.subr.mxu0 0.0
    %148 = vmatpush1.msra.mxu0 %v130
    %149 = vmatprep.subr.mxu0 0.0
    %150 = vmatpush1.msra.mxu0 %v129
    %151 = vmatprep.subr.mxu0 0.0
    %152 = vmatpush1.msra.mxu0 %v128
    %153 = vmatprep.subr.mxu0 0.0
    %154 = vmatpush1.msra.mxu0 %v127
    %155 = vmatprep.subr.mxu0 0.0
    %156 = vmatpush1.msra.mxu0 %v126
    %157 = vmatprep.subr.mxu0 0.0
    %158 = vmatpush1.msra.mxu0 %v125
    %159 = vmatprep.subr.mxu0 0.0
    %160 = vmatpush1.msra.mxu0 %v124
    %161 = vmatprep.subr.mxu0 0.0
    %162 = vmatpush1.msra.mxu0 %v123
    %163 = vmatprep.subr.mxu0 0.0
    %164 = vmatpush1.msra.mxu0 %v122
    %165 = vmatprep.subr.mxu0 0.0
    %166 = vmatpush1.msra.mxu0 %v121
    %167 = vmatprep.subr.mxu0 0.0
    %168 = vmatpush1.msra.mxu0 %v120
    %169 = vmatprep.subr.mxu0 0.0
    %170 = vmatpush1.msra.mxu0 %v119
    %171 = vmatprep.subr.mxu0 0.0
    %172 = vmatpush1.msra.mxu0 %v118
    %173 = vmatprep.subr.mxu0 0.0
    %174 = vmatpush2.msra.mxu0 0.0
    %175 = vmatprep.subr.mxu0 0.0
    %176 = vmatpush2.msra.mxu0 0.0
    %177 = vmatprep.subr.mxu0 0.0
    %178 = vmatpush2.msra.mxu0 0.0
    %179 = vmatprep.subr.mxu0 0.0
    %180 = vmatpush2.msra.mxu0 0.0
    %181 = vmatprep.subr.mxu0 0.0
    %182 = vmatpush2.msra.mxu0 0.0
    %183 = vmatprep.subr.mxu0 0.0
    %184 = vmatpush2.msra.mxu0 0.0
    %185 = vmatprep.subr.mxu0 0.0
    %186 = vmatpush2.msra.mxu0 0.0
    %187 = vmatprep.subr.mxu0 0.0
    %188 = vmatpush2.msra.mxu0 0.0
    %189 = vmatprep.subr.mxu0 0.0
    %190 = vmatpush2.msra.mxu0 0.0
    %191 = vmatprep.subr.mxu0 0.0
    %192 = vmatpush2.msra.mxu0 0.0
    %193 = vmatprep.subr.mxu0 0.0
    %194 = vmatpush2.msra.mxu0 0.0
    %195 = vmatprep.subr.mxu0 0.0
    %196 = vmatpush2.msra.mxu0 0.0
    %197 = vmatprep.subr.mxu0 0.0
    %198 = vmatpush2.msra.mxu0 0.0
    %199 = vmatprep.subr.mxu0 0.0
    %200 = vmatpush2.msra.mxu0 0.0
    %201 = vmatprep.subr.mxu0 0.0
    %202 = vmatpush2.msra.mxu0 0.0
    %203 = vmatprep.subr.mxu0 0.0
    %204 = vmatpush2.msra.mxu0 0.0
    %205 = vmatprep.mubr.f32.mxu0 0.0
    %206 = vmatmul.mubr.f32.gmra.mxu0 %v117
    %v207 = vpop.f32.mrf.mxu0
    %v208 = vadd.f32 %v139, %v207
    %v209 = vpop.f32.mrf.mxu0
    %210 = vdwg.mxu0
    %v211 = vmax.f32 %v208, 0.0
    %v212 = vld [vmem:[#allocation8] sm:$0xff]
    %v213 = vld [vmem:[#allocation8 + $0x8] sm:$0xff]
    %v214 = vld [vmem:[#allocation8 + $0x10] sm:$0xff]
    %v215 = vld [vmem:[#allocation8 + $0x18] sm:$0xff]
    %v216 = vld [vmem:[#allocation8 + $0x20] sm:$0xff]
    %v217 = vld [vmem:[#allocation8 + $0x28] sm:$0xff]
    %v218 = vld [vmem:[#allocation8 + $0x30] sm:$0xff]
    %v219 = vld [vmem:[#allocation8 + $0x38] sm:$0xff]
    %v220 = vld [vmem:[#allocation8 + $0x40] sm:$0xff]
    %v221 = vld [vmem:[#allocation8 + $0x48] sm:$0xff]
    %v222 = vld [vmem:[#allocation8 + $0x50] sm:$0xff]
    %v223 = vld [vmem:[#allocation8 + $0x58] sm:$0xff]
    %v224 = vld [vmem:[#allocation8 + $0x60] sm:$0xff]
    %v225 = vld [vmem:[#allocation8 + $0x68] sm:$0xff]
    %v226 = vld [vmem:[#allocation8 + $0x70] sm:$0xff]
    %v227 = vld [vmem:[#allocation8 + $0x78] sm:$0xff]
    %v228 = vld [vmem:[#allocation8 + $0x80] sm:$0xff]
    %v229 = vld [vmem:[#allocation8 + $0x88] sm:$0xff]
    %v230 = vld [vmem:[#allocation8 + $0x90] sm:$0xff]
    %v231 = vld [vmem:[#allocation8 + $0x98] sm:$0xff]
    %v232 = vld [vmem:[#allocation8 + $0xa0] sm:$0xff]
    %v233 = vld [vmem:[#allocation8 + $0xa8] sm:$0xff]
    %v234 = vld [vmem:[#allocation8 + $0xb0] sm:$0xff]
    %v235 = vld [vmem:[#allocation8 + $0xb8] sm:$0xff]
    %v236 = vld [vmem:[#allocation8 + $0xc0] sm:$0xff]
    %v237 = vld [vmem:[#allocation8 + $0xc8] sm:$0xff]
    %v238 = vld [vmem:[#allocation8 + $0xd0] sm:$0xff]
    %v239 = vld [vmem:[#allocation8 + $0xd8] sm:$0xff]
    %v240 = vld [vmem:[#allocation8 + $0xe0] sm:$0xff]
    %v241 = vld [vmem:[#allocation8 + $0xe8] sm:$0xff]
    %v242 = vld [vmem:[#allocation8 + $0xf0] sm:$0xff]
    %v243 = vld [vmem:[#allocation8 + $0xf8] sm:$0xff]
    %v244 = vld [vmem:[%s5] sm:$0x3]
    %v246 = vlaneseq
    %v247 = vshrl.u32 %v246, 7
    %v248 = vsub.s32 0, %v247
    %v249 = vrot.slane %v244, %v248
    %v250 = vlaneseq
    %v251 = vshrl.u32 %v250, 7
    %v252 = vsub.s32 1, %v251
    %v253 = vrot.slane %v244, %v252
    %256 = vmatprep.subr.mxu0 %v243
    %257 = vmatpush1.msra.mxu0 %v242
    %258 = vmatprep.subr.mxu0 %v241
    %259 = vmatpush1.msra.mxu0 %v240
    %260 = vmatprep.subr.mxu0 %v239
    %261 = vmatpush1.msra.mxu0 %v238
    %262 = vmatprep.subr.mxu0 %v237
    %263 = vmatpush1.msra.mxu0 %v236
    %264 = vmatprep.subr.mxu0 %v235
    %265 = vmatpush1.msra.mxu0 %v234
    %266 = vmatprep.subr.mxu0 %v233
    %267 = vmatpush1.msra.mxu0 %v232
    %268 = vmatprep.subr.mxu0 %v231
    %269 = vmatpush1.msra.mxu0 %v230
    %270 = vmatprep.subr.mxu0 %v229
    %271 = vmatpush1.msra.mxu0 %v228
    %272 = vmatprep.subr.mxu0 %v227
    %273 = vmatpush1.msra.mxu0 %v226
    %274 = vmatprep.subr.mxu0 %v225
    %275 = vmatpush1.msra.mxu0 %v224
    %276 = vmatprep.subr.mxu0 %v223
    %277 = vmatpush1.msra.mxu0 %v222
    %278 = vmatprep.subr.mxu0 %v221
    %279 = vmatpush1.msra.mxu0 %v220
    %280 = vmatprep.subr.mxu0 %v219
    %281 = vmatpush1.msra.mxu0 %v218
    %282 = vmatprep.subr.mxu0 %v217
    %283 = vmatpush1.msra.mxu0 %v216
    %284 = vmatprep.subr.mxu0 %v215
    %285 = vmatpush1.msra.mxu0 %v214
    %286 = vmatprep.subr.mxu0 %v213
    %287 = vmatpush1.msra.mxu0 %v212
    %288 = vmatprep.subr.mxu0 0.0
    %289 = vmatpush2.msra.mxu0 0.0
    %290 = vmatprep.subr.mxu0 0.0
    %291 = vmatpush2.msra.mxu0 0.0
    %292 = vmatprep.subr.mxu0 0.0
    %293 = vmatpush2.msra.mxu0 0.0
    %294 = vmatprep.subr.mxu0 0.0
    %295 = vmatpush2.msra.mxu0 0.0
    %296 = vmatprep.subr.mxu0 0.0
    %297 = vmatpush2.msra.mxu0 0.0
    %298 = vmatprep.subr.mxu0 0.0
    %299 = vmatpush2.msra.mxu0 0.0
    %300 = vmatprep.subr.mxu0 0.0
    %301 = vmatpush2.msra.mxu0 0.0
    %302 = vmatprep.subr.mxu0 0.0
    %303 = vmatpush2.msra.mxu0 0.0
    %304 = vmatprep.subr.mxu0 0.0
    %305 = vmatpush2.msra.mxu0 0.0
    %306 = vmatprep.subr.mxu0 0.0
    %307 = vmatpush2.msra.mxu0 0.0
    %308 = vmatprep.subr.mxu0 0.0
    %309 = vmatpush2.msra.mxu0 0.0
    %310 = vmatprep.subr.mxu0 0.0
    %311 = vmatpush2.msra.mxu0 0.0
    %312 = vmatprep.subr.mxu0 0.0
    %313 = vmatpush2.msra.mxu0 0.0
    %314 = vmatprep.subr.mxu0 0.0
    %315 = vmatpush2.msra.mxu0 0.0
    %316 = vmatprep.subr.mxu0 0.0
    %317 = vmatpush2.msra.mxu0 0.0
    %318 = vmatprep.subr.mxu0 0.0
    %319 = vmatpush2.msra.mxu0 0.0
    %320 = vmatprep.mubr.f32.mxu0 0.0
    %321 = vmatmul.mubr.f32.gmra.mxu0 %v211
    %v322 = vpop.f32.mrf.mxu0
    %v323 = vadd.f32 %v249, %v322
    %v324 = vpop.f32.mrf.mxu0
    %v325 = vadd.f32 %v253, %v324
    %326 = vdwg.mxu0
    %327 = vst [vmem:[#allocation14] sm:$0xff] %v323
    %328 = vst [vmem:[#allocation14 + $0x8] sm:$0xff] %v325
    %v329 = vmul.f32 %v325, 0.5
    %v330 = vmul.f32 %v329, 1.442695
    %v331 = vpow.pop %v330
    %v332 = vld [vmem:[#allocation5] sm:$0xff]
    %v333 = vmul.f32 %v332, %v331
    %v334 = vadd.f32 %v323, %v333
    %v335 = vld [vmem:[#allocation10] sm:$0xff]
    %v336 = vld [vmem:[#allocation10 + $0x8] sm:$0xff]
    %v337 = vld [vmem:[#allocation10 + $0x10] sm:$0xff]
    %v338 = vld [vmem:[#allocation10 + $0x18] sm:$0xff]
    %v339 = vld [vmem:[#allocation10 + $0x20] sm:$0xff]
    %v340 = vld [vmem:[#allocation10 + $0x28] sm:$0xff]
    %v341 = vld [vmem:[#allocation10 + $0x30] sm:$0xff]
    %v342 = vld [vmem:[#allocation10 + $0x38] sm:$0xff]
    %v343 = vld [vmem:[#allocation10 + $0x40] sm:$0xff]
    %v344 = vld [vmem:[#allocation10 + $0x48] sm:$0xff]
    %v345 = vld [vmem:[#allocation10 + $0x50] sm:$0xff]
    %v346 = vld [vmem:[#allocation10 + $0x58] sm:$0xff]
    %v347 = vld [vmem:[#allocation10 + $0x60] sm:$0xff]
    %v348 = vld [vmem:[#allocation10 + $0x68] sm:$0xff]
    %v349 = vld [vmem:[#allocation10 + $0x70] sm:$0xff]
    %v350 = vld [vmem:[#allocation10 + $0x78] sm:$0xff]
    %v351 = vld [vmem:[%s7] sm:$0x1]
    %v353 = vlaneseq
    %v354 = vshrl.u32 %v353, 7
    %v355 = vsub.s32 0, %v354
    %v356 = vrot.slane %v351, %v355
    %358 = vmatprep.subr.mxu0 0.0
    %359 = vmatpush1.msra.mxu0 %v350
    %360 = vmatprep.subr.mxu0 0.0
    %361 = vmatpush1.msra.mxu0 %v349
    %362 = vmatprep.subr.mxu0 0.0
    %363 = vmatpush1.msra.mxu0 %v348
    %364 = vmatprep.subr.mxu0 0.0
    %365 = vmatpush1.msra.mxu0 %v347
    %366 = vmatprep.subr.mxu0 0.0
    %367 = vmatpush1.msra.mxu0 %v346
    %368 = vmatprep.subr.mxu0 0.0
    %369 = vmatpush1.msra.mxu0 %v345
    %370 = vmatprep.subr.mxu0 0.0
    %371 = vmatpush1.msra.mxu0 %v344
    %372 = vmatprep.subr.mxu0 0.0
    %373 = vmatpush1.msra.mxu0 %v343
    %374 = vmatprep.subr.mxu0 0.0
    %375 = vmatpush1.msra.mxu0 %v342
    %376 = vmatprep.subr.mxu0 0.0
    %377 = vmatpush1.msra.mxu0 %v341
    %378 = vmatprep.subr.mxu0 0.0
    %379 = vmatpush1.msra.mxu0 %v340
    %380 = vmatprep.subr.mxu0 0.0
    %381 = vmatpush1.msra.mxu0 %v339
    %382 = vmatprep.subr.mxu0 0.0
    %383 = vmatpush1.msra.mxu0 %v338
    %384 = vmatprep.subr.mxu0 0.0
    %385 = vmatpush1.msra.mxu0 %v337
    %386 = vmatprep.subr.mxu0 0.0
    %387 = vmatpush1.msra.mxu0 %v336
    %388 = vmatprep.subr.mxu0 0.0
    %389 = vmatpush1.msra.mxu0 %v335
    %390 = vmatprep.subr.mxu0 0.0
    %391 = vmatpush2.msra.mxu0 0.0
    %392 = vmatprep.subr.mxu0 0.0
    %393 = vmatpush2.msra.mxu0 0.0
    %394 = vmatprep.subr.mxu0 0.0
    %395 = vmatpush2.msra.mxu0 0.0
    %396 = vmatprep.subr.mxu0 0.0
    %397 = vmatpush2.msra.mxu0 0.0
    %398 = vmatprep.subr.mxu0 0.0
    %399 = vmatpush2.msra.mxu0 0.0
    %400 = vmatprep.subr.mxu0 0.0
    %401 = vmatpush2.msra.mxu0 0.0
    %402 = vmatprep.subr.mxu0 0.0
    %403 = vmatpush2.msra.mxu0 0.0
    %404 = vmatprep.subr.mxu0 0.0
    %405 = vmatpush2.msra.mxu0 0.0
    %406 = vmatprep.subr.mxu0 0.0
    %407 = vmatpush2.msra.mxu0 0.0
    %408 = vmatprep.subr.mxu0 0.0
    %409 = vmatpush2.msra.mxu0 0.0
    %410 = vmatprep.subr.mxu0 0.0
    %411 = vmatpush2.msra.mxu0 0.0
    %412 = vmatprep.subr.mxu0 0.0
    %413 = vmatpush2.msra.mxu0 0.0
    %414 = vmatprep.subr.mxu0 0.0
    %415 = vmatpush2.msra.mxu0 0.0
    %416 = vmatprep.subr.mxu0 0.0
    %417 = vmatpush2.msra.mxu0 0.0
    %418 = vmatprep.subr.mxu0 0.0
    %419 = vmatpush2.msra.mxu0 0.0
    %420 = vmatprep.subr.mxu0 0.0
    %421 = vmatpush2.msra.mxu0 0.0
    %422 = vmatprep.mubr.f32.mxu0 0.0
    %423 = vmatmul.mubr.f32.gmra.mxu0 %v334
    %v424 = vpop.f32.mrf.mxu0
    %v425 = vadd.f32 %v356, %v424
    %v426 = vpop.f32.mrf.mxu0
    %427 = vdwg.mxu0
    %v428 = vmax.f32 %v425, 0.0
    %v429 = vld [vmem:[#allocation11] sm:$0xff]
    %v430 = vld [vmem:[#allocation11 + $0x8] sm:$0xff]
    %v431 = vld [vmem:[#allocation11 + $0x10] sm:$0xff]
    %v432 = vld [vmem:[#allocation11 + $0x18] sm:$0xff]
    %v433 = vld [vmem:[#allocation11 + $0x20] sm:$0xff]
    %v434 = vld [vmem:[#allocation11 + $0x28] sm:$0xff]
    %v435 = vld [vmem:[#allocation11 + $0x30] sm:$0xff]
    %v436 = vld [vmem:[#allocation11 + $0x38] sm:$0xff]
    %v437 = vld [vmem:[#allocation11 + $0x40] sm:$0xff]
    %v438 = vld [vmem:[#allocation11 + $0x48] sm:$0xff]
    %v439 = vld [vmem:[#allocation11 + $0x50] sm:$0xff]
    %v440 = vld [vmem:[#allocation11 + $0x58] sm:$0xff]
    %v441 = vld [vmem:[#allocation11 + $0x60] sm:$0xff]
    %v442 = vld [vmem:[#allocation11 + $0x68] sm:$0xff]
    %v443 = vld [vmem:[#allocation11 + $0x70] sm:$0xff]
    %v444 = vld [vmem:[#allocation11 + $0x78] sm:$0xff]
    %v445 = vld [vmem:[%s9] sm:$0x1]
    %v447 = vlaneseq
    %v448 = vshrl.u32 %v447, 7
    %v449 = vsub.s32 0, %v448
    %v450 = vrot.slane %v445, %v449
    %452 = vmatprep.subr.mxu0 0.0
    %453 = vmatpush1.msra.mxu0 %v444
    %454 = vmatprep.subr.mxu0 0.0
    %455 = vmatpush1.msra.mxu0 %v443
    %456 = vmatprep.subr.mxu0 0.0
    %457 = vmatpush1.msra.mxu0 %v442
    %458 = vmatprep.subr.mxu0 0.0
    %459 = vmatpush1.msra.mxu0 %v441
    %460 = vmatprep.subr.mxu0 0.0
    %461 = vmatpush1.msra.mxu0 %v440
    %462 = vmatprep.subr.mxu0 0.0
    %463 = vmatpush1.msra.mxu0 %v439
    %464 = vmatprep.subr.mxu0 0.0
    %465 = vmatpush1.msra.mxu0 %v438
    %466 = vmatprep.subr.mxu0 0.0
    %467 = vmatpush1.msra.mxu0 %v437
    %468 = vmatprep.subr.mxu0 0.0
    %469 = vmatpush1.msra.mxu0 %v436
    %470 = vmatprep.subr.mxu0 0.0
    %471 = vmatpush1.msra.mxu0 %v435
    %472 = vmatprep.subr.mxu0 0.0
    %473 = vmatpush1.msra.mxu0 %v434
    %474 = vmatprep.subr.mxu0 0.0
    %475 = vmatpush1.msra.mxu0 %v433
    %476 = vmatprep.subr.mxu0 0.0
    %477 = vmatpush1.msra.mxu0 %v432
    %478 = vmatprep.subr.mxu0 0.0
    %479 = vmatpush1.msra.mxu0 %v431
    %480 = vmatprep.subr.mxu0 0.0
    %481 = vmatpush1.msra.mxu0 %v430
    %482 = vmatprep.subr.mxu0 0.0
    %483 = vmatpush1.msra.mxu0 %v429
    %484 = vmatprep.subr.mxu0 0.0
    %485 = vmatpush2.msra.mxu0 0.0
    %486 = vmatprep.subr.mxu0 0.0
    %487 = vmatpush2.msra.mxu0 0.0
    %488 = vmatprep.subr.mxu0 0.0
    %489 = vmatpush2.msra.mxu0 0.0
    %490 = vmatprep.subr.mxu0 0.0
    %491 = vmatpush2.msra.mxu0 0.0
    %492 = vmatprep.subr.mxu0 0.0
    %493 = vmatpush2.msra.mxu0 0.0
    %494 = vmatprep.subr.mxu0 0.0
    %495 = vmatpush2.msra.mxu0 0.0
    %496 = vmatprep.subr.mxu0 0.0
    %497 = vmatpush2.msra.mxu0 0.0
    %498 = vmatprep.subr.mxu0 0.0
    %499 = vmatpush2.msra.mxu0 0.0
    %500 = vmatprep.subr.mxu0 0.0
    %501 = vmatpush2.msra.mxu0 0.0
    %502 = vmatprep.subr.mxu0 0.0
    %503 = vmatpush2.msra.mxu0 0.0
    %504 = vmatprep.subr.mxu0 0.0
    %505 = vmatpush2.msra.mxu0 0.0
    %506 = vmatprep.subr.mxu0 0.0
    %507 = vmatpush2.msra.mxu0 0.0
    %508 = vmatprep.subr.mxu0 0.0
    %509 = vmatpush2.msra.mxu0 0.0
    %510 = vmatprep.subr.mxu0 0.0
    %511 = vmatpush2.msra.mxu0 0.0
    %512 = vmatprep.subr.mxu0 0.0
    %513 = vmatpush2.msra.mxu0 0.0
    %514 = vmatprep.subr.mxu0 0.0
    %515 = vmatpush2.msra.mxu0 0.0
    %516 = vmatprep.mubr.f32.mxu0 0.0
    %517 = vmatmul.mubr.f32.gmra.mxu0 %v428
    %v518 = vpop.f32.mrf.mxu0
    %v519 = vadd.f32 %v450, %v518
    %v520 = vpop.f32.mrf.mxu0
    %521 = vdwg.mxu0
    %v522 = vxor.u32 %v519, 2147483648
    %v523 = vmul.f32 %v522, 1.442695
    %v524 = vpow.pop %v523
    %v525 = vadd.f32 %v524, 1.0
    %v526 = vrcp.pop %v525
    %v527 = vmul.f32 1.0, %v526
    %528 = vst [vmem:[#allocation13] sm:$0xff] %v527
    // Predicated region
    $region66: #{tpu_custom_call.1} parent=1 // pred_check
      _
    $region67: #{tpu_custom_call.1} parent=1 // pred_check_branch
      %530 = sbr.rel (0) target = $region69
    $region68: #{tpu_custom_call.1} parent=1 // pred_region
      %s532 = ssub.s32 128, 128
      %533 = vsyncadd [#allocation4], %s532
      %s535 = sshll.u32 [#allocation13], 4
      %s536 = int_to_ptr.vmem [resolvable:$true] %s535
      %538 = dma.vmem_to_hbm [thread:$0]  %s536, 128, %s10, [#allocation4]
    $region69: #{tpu_custom_call.1} parent=1 // pred_fallthru
      _
    // Predicated region
    $region70: #{tpu_custom_call.1} parent=1 // pred_check
      _
    $region71: #{tpu_custom_call.1} parent=1 // pred_check_branch
      %540 = sbr.rel (0) target = $region73
    $region72: #{tpu_custom_call.1} parent=1 // pred_region
      %s542 = ssub.s32 256, 256
      %543 = vsyncadd [#allocation15], %s542
      %s545 = sshll.u32 [#allocation14], 4
      %s546 = int_to_ptr.vmem [resolvable:$true] %s545
      %548 = dma.vmem_to_hbm [thread:$0]  %s546, 256, %s11, [#allocation15]
    $region73: #{tpu_custom_call.1} parent=1 // pred_fallthru
      _
    // Predicated region
    $region74: #{tpu_custom_call.1} parent=1 // pred_check
      _
    $region75: #{tpu_custom_call.1} parent=1 // pred_check_branch
      %550 = sbr.rel (0) target = $region77
    $region76: #{tpu_custom_call.1} parent=1 // pred_region
      %551 = dma.done [#allocation4], 128
    $region77: #{tpu_custom_call.1} parent=1 // pred_fallthru
      _
    // Predicated region
    $region78: #{tpu_custom_call.1} parent=1 // pred_check
      _
    $region79: #{tpu_custom_call.1} parent=1 // pred_check_branch
      %553 = sbr.rel (0) target = $region81
    $region80: #{tpu_custom_call.1} parent=1 // pred_region
      %554 = dma.done [#allocation15], 256
    $region81: #{tpu_custom_call.1} parent=1 // pred_fallthru
      _
    %555 = vsyncpa [#allocation3], 1
    %556 = vsyncpa [#allocation6], 1
    %557 = vsyncpa [#allocation9], 1
    %558 = vsyncpa [#allocation12], 1
    %559 = vsyncpa [#allocation4], 1
    %560 = vsyncpa [#allocation15], 1

</llo_original>
